<compile_context>
chip_gen: v5e
topology: v5e:2x2
jax: 0.10.0
libtpu: 0.0.40
codegen_flags: <defaults>
</compile_context>

<pallas_src>
import jax
import jax.numpy as jnp
from jax.experimental import pallas as pl
from jax.experimental.pallas import tpu as pltpu

IN_FEATURES = 64 * 10      # 640
HIDDEN = 128
NUM_CLASSES = 2
PAD_OUT = 128              # fc2 output padded to a full lane width
TILE_B_MAX = 512           # rows per grid step (multiple of 128, fits VMEM easily)
NEG_FILL = -1e30           # bias fill for padded fc2 columns (exp underflows to 0)


def _round_up(n, m):
    return ((n + m - 1) // m) * m


def _disc_kernel(x_ref, w1_ref, b1_ref, w2_ref, b2_ref, o_ref):
    # x: (TILE_B, 640) bf16; w1: (640, 128) bf16; b1: (1, 128) f32
    # w2: (128, 128) bf16 (cols >= 2 are zero); b2: (1, 128) f32 (cols >= 2 = NEG_FILL)
    x = x_ref[...]
    h = jnp.dot(x, w1_ref[...], preferred_element_type=jnp.float32)
    h = jnp.maximum(h + b1_ref[...], 0.0)                       # f32 ReLU

    z = jnp.dot(h.astype(jnp.bfloat16), w2_ref[...],
                preferred_element_type=jnp.float32) + b2_ref[...]  # (TILE_B, 128) f32

    # log_softmax: padded lanes hold z ~= NEG_FILL, so they never win the max
    # and exp(z - m) underflows to exactly 0 there (no inf / NaN, no mask).
    m = jnp.max(z, axis=1, keepdims=True)
    e = jnp.exp(z - m)
    s = jnp.sum(e, axis=1, keepdims=True)
    o_ref[...] = (z - m - jnp.log(s)).astype(o_ref.dtype)


def prepare_params(w1, b1, w2, b2):
    """One-time parameter prep: bf16 casts + lane padding of the fc2 head."""
    w1_bf = w1.astype(jnp.bfloat16)                                     # (640, 128)
    b1_r = b1.reshape(1, HIDDEN).astype(jnp.float32)                    # (1, 128)
    w2_p = (jnp.zeros((HIDDEN, PAD_OUT), jnp.bfloat16)
            .at[:, :NUM_CLASSES].set(w2.astype(jnp.bfloat16)))          # (128, 128)
    b2_p = (jnp.full((1, PAD_OUT), NEG_FILL, jnp.float32)
            .at[0, :NUM_CLASSES].set(b2.astype(jnp.float32)))           # (1, 128)
    return w1_bf, b1_r, w2_p, b2_p


@jax.jit
def discriminator_forward(x, w1_bf, b1_r, w2_p, b2_p, constant=1.0):
    """Forward pass.  `constant` only scales the GradReverse backward pass, so
    it is ignored here (forward is the identity)."""
    del constant
    B = x.shape[0]

    # Batch tiling: 16-row granularity (bf16 sublane packing), capped at TILE_B_MAX.
    tile_b = min(TILE_B_MAX, _round_up(B, 16))
    b_pad = _round_up(B, tile_b)

    x = x.astype(jnp.bfloat16)
    if b_pad != B:
        x = jnp.pad(x, ((0, b_pad - B), (0, 0)))

    grid = (b_pad // tile_b,)

    cost = pl.CostEstimate(
        flops=2 * b_pad * (IN_FEATURES * HIDDEN + HIDDEN * PAD_OUT),
        transcendentals=b_pad * (PAD_OUT + 1),
        bytes_accessed=(b_pad * IN_FEATURES * 2            # x (bf16)
                        + IN_FEATURES * HIDDEN * 2          # w1 (bf16)
                        + HIDDEN * 4                        # b1
                        + HIDDEN * PAD_OUT * 2              # w2 (bf16)
                        + PAD_OUT * 4                       # b2
                        + b_pad * PAD_OUT * 4))             # out (f32)

    out = pl.pallas_call(
        _disc_kernel,
        out_shape=jax.ShapeDtypeStruct((b_pad, PAD_OUT), jnp.float32),
        grid=grid,
        in_specs=[
            pl.BlockSpec((tile_b, IN_FEATURES), lambda i: (i, 0)),   # x: streamed
            pl.BlockSpec((IN_FEATURES, HIDDEN), lambda i: (0, 0)),   # w1: resident
            pl.BlockSpec((1, HIDDEN), lambda i: (0, 0)),             # b1: resident
            pl.BlockSpec((HIDDEN, PAD_OUT), lambda i: (0, 0)),       # w2: resident
            pl.BlockSpec((1, PAD_OUT), lambda i: (0, 0)),            # b2: resident
        ],
        out_specs=pl.BlockSpec((tile_b, PAD_OUT), lambda i: (i, 0)),
        compiler_params=pltpu.CompilerParams(
            dimension_semantics=("parallel",)),
        cost_estimate=cost,
    )(x, w1_bf, b1_r, w2_p, b2_p)

    return out[:B, :NUM_CLASSES]


def _init_linear(key, fan_in, fan_out):
    """torch.nn.Linear default init: U(-1/sqrt(fan_in), 1/sqrt(fan_in))."""
    kw, kb = jax.random.split(key)
    bound = 1.0 / jnp.sqrt(fan_in)
    w = jax.random.uniform(kw, (fan_in, fan_out), jnp.float32, -bound, bound)
    b = jax.random.uniform(kb, (fan_out,), jnp.float32, -bound, bound)
    return w, b


def _reference_bf16(x, w1, b1, w2, b2):
    """Matched-precision reference: bf16 operands, f32 accumulation."""
    h = jnp.dot(x.astype(jnp.bfloat16), w1.astype(jnp.bfloat16),
                preferred_element_type=jnp.float32) + b1
    h = jnp.maximum(h, 0.0)
    z = jnp.dot(h.astype(jnp.bfloat16), w2.astype(jnp.bfloat16),
                preferred_element_type=jnp.float32) + b2
    return jax.nn.log_softmax(z, axis=1)


def _reference_f32(x, w1, b1, w2, b2):
    h = jnp.maximum(x @ w1 + b1, 0.0)
    z = h @ w2 + b2
    return jax.nn.log_softmax(z, axis=1)


if __name__ == "__main__":
    key = jax.random.PRNGKey(0)
    k_x, k_fc1, k_fc2 = jax.random.split(key, 3)

    B = 8
    x = jax.random.normal(k_x, (B, IN_FEATURES), dtype=jnp.float32)
    w1, b1 = _init_linear(k_fc1, IN_FEATURES, HIDDEN)
    w2, b2 = _init_linear(k_fc2, HIDDEN, NUM_CLASSES)
    constant = 1.0  # GradReverse scaling; irrelevant to forward

    params = prepare_params(w1, b1, w2, b2)
    out = discriminator_forward(x, *params, constant)
    out = jax.block_until_ready(out)

    assert out.shape == (B, NUM_CLASSES)
    assert bool(jnp.all(jnp.isfinite(out))), "non-finite log-probs"

    ref_bf = _reference_bf16(x, w1, b1, w2, b2)
    ref_f32 = _reference_f32(x, w1, b1, w2, b2)
    assert jnp.allclose(out, ref_bf, atol=2e-3, rtol=2e-3), \
        "mismatch vs matched-precision (bf16-operand) reference"
    assert jnp.allclose(out, ref_f32, atol=5e-2, rtol=5e-2), \
        "mismatch vs f32 reference"

    print("KERNEL_OK")
</pallas_src>

<mosaic_0001>
module attributes {stable_mosaic.version = 11 : i64} {
  func.func @_disc_kernel(%arg0: i32, %arg1: memref<16x640xbf16, #tpu.memory_space<vmem>>, %arg2: memref<640x128xbf16, #tpu.memory_space<vmem>>, %arg3: memref<1x128xf32, #tpu.memory_space<vmem>>, %arg4: memref<128x128xbf16, #tpu.memory_space<vmem>>, %arg5: memref<1x128xf32, #tpu.memory_space<vmem>>, %arg6: memref<16x128xf32, #tpu.memory_space<vmem>>) attributes {dimension_semantics = [#tpu.dimension_semantics<parallel>], iteration_bounds = array<i64: 1>, scalar_prefetch = 0 : i64, scratch_operands = 0 : i64, tpu.core_type = #tpu.core_type<tc>, window_params = [{transform_indices = @transform_0, window_bounds = array<i64: 16, 640>}, {pipeline_mode = #tpu.pipeline_mode<synchronous>, transform_indices = @transform_1, window_bounds = array<i64: 640, 128>}, {pipeline_mode = #tpu.pipeline_mode<synchronous>, transform_indices = @transform_2, window_bounds = array<i64: 1, 128>}, {pipeline_mode = #tpu.pipeline_mode<synchronous>, transform_indices = @transform_3, window_bounds = array<i64: 128, 128>}, {pipeline_mode = #tpu.pipeline_mode<synchronous>, transform_indices = @transform_4, window_bounds = array<i64: 1, 128>}, {transform_indices = @transform_5, window_bounds = array<i64: 16, 128>}]} {
    %c0 = arith.constant 0 : index
    %c0_0 = arith.constant 0 : index
    %0 = vector.load %arg1[%c0, %c0_0] : memref<16x640xbf16, #tpu.memory_space<vmem>>, vector<16x640xbf16>
    %c0_1 = arith.constant 0 : index
    %c0_2 = arith.constant 0 : index
    %1 = vector.load %arg2[%c0_1, %c0_2] : memref<640x128xbf16, #tpu.memory_space<vmem>>, vector<640x128xbf16>
    %cst = arith.constant dense<0.000000e+00> : vector<16x128xf32>
    %2 = tpu.matmul %0, %1, %cst {dimension_numbers = #tpu.dot_dimension_numbers<[1], [0], [0], [1], [0, 0, 1, 1], [], []>} : vector<16x640xbf16>, vector<640x128xbf16>, vector<16x128xf32> -> vector<16x128xf32>
    %c0_3 = arith.constant 0 : index
    %c0_4 = arith.constant 0 : index
    %3 = vector.load %arg3[%c0_3, %c0_4] : memref<1x128xf32, #tpu.memory_space<vmem>>, vector<1x128xf32>
    %4 = vector.broadcast %3 : vector<1x128xf32> to vector<16x128xf32>
    %5 = arith.addf %2, %4 : vector<16x128xf32>
    %cst_5 = arith.constant 0.000000e+00 : f32
    %6 = vector.broadcast %cst_5 : f32 to vector<16x128xf32>
    %7 = arith.maximumf %5, %6 : vector<16x128xf32>
    %8 = arith.truncf %7 : vector<16x128xf32> to vector<16x128xbf16>
    %c0_6 = arith.constant 0 : index
    %c0_7 = arith.constant 0 : index
    %9 = vector.load %arg4[%c0_6, %c0_7] : memref<128x128xbf16, #tpu.memory_space<vmem>>, vector<128x128xbf16>
    %cst_8 = arith.constant dense<0.000000e+00> : vector<16x128xf32>
    %10 = tpu.matmul %8, %9, %cst_8 {dimension_numbers = #tpu.dot_dimension_numbers<[1], [0], [0], [1], [0, 0, 1, 1], [], []>} : vector<16x128xbf16>, vector<128x128xbf16>, vector<16x128xf32> -> vector<16x128xf32>
    %c0_9 = arith.constant 0 : index
    %c0_10 = arith.constant 0 : index
    %11 = vector.load %arg5[%c0_9, %c0_10] : memref<1x128xf32, #tpu.memory_space<vmem>>, vector<1x128xf32>
    %12 = vector.broadcast %11 : vector<1x128xf32> to vector<16x128xf32>
    %13 = arith.addf %10, %12 : vector<16x128xf32>
    %cst_11 = arith.constant dense<0xFF800000> : vector<16xf32>
    %14 = vector.multi_reduction <maximumf>, %13, %cst_11 [1] : vector<16x128xf32> to vector<16xf32>
    %15 = vector.shape_cast %14 : vector<16xf32> to vector<16x1xf32>
    %16 = vector.broadcast %15 : vector<16x1xf32> to vector<16x128xf32>
    %17 = arith.subf %13, %16 : vector<16x128xf32>
    %18 = math.exp %17 : vector<16x128xf32>
    %cst_12 = arith.constant dense<0.000000e+00> : vector<16xf32>
    %19 = vector.multi_reduction <add>, %18, %cst_12 [1] : vector<16x128xf32> to vector<16xf32>
    %20 = vector.shape_cast %19 : vector<16xf32> to vector<16x1xf32>
    %21 = vector.broadcast %15 : vector<16x1xf32> to vector<16x128xf32>
    %22 = arith.subf %13, %21 : vector<16x128xf32>
    %23 = math.log %20 : vector<16x1xf32>
    %24 = vector.broadcast %23 : vector<16x1xf32> to vector<16x128xf32>
    %25 = arith.subf %22, %24 : vector<16x128xf32>
    %c0_13 = arith.constant 0 : index
    %c0_14 = arith.constant 0 : index
    %26 = vector.load %arg6[%c0_13, %c0_14] : memref<16x128xf32, #tpu.memory_space<vmem>>, vector<16x128xf32>
    tpu.vector_store %arg6[%c0_13, %c0_14], %25 {strides = array<i32>} : memref<16x128xf32, #tpu.memory_space<vmem>>, vector<16x128xf32>,
    return
  }
  func.func @transform_0(%arg0: i32) -> (i32, i32) {
    %c0_i32 = arith.constant 0 : i32
    %c0_i32_0 = arith.constant 0 : i32
    return %arg0, %c0_i32 : i32, i32
  }
  func.func @transform_1(%arg0: i32) -> (i32, i32) {
    %c0_i32 = arith.constant 0 : i32
    %c0_i32_0 = arith.constant 0 : i32
    %c0_i32_1 = arith.constant 0 : i32
    return %c0_i32, %c0_i32_0 : i32, i32
  }
  func.func @transform_2(%arg0: i32) -> (i32, i32) {
    %c0_i32 = arith.constant 0 : i32
    %c0_i32_0 = arith.constant 0 : i32
    %c0_i32_1 = arith.constant 0 : i32
    return %c0_i32, %c0_i32_0 : i32, i32
  }
  func.func @transform_3(%arg0: i32) -> (i32, i32) {
    %c0_i32 = arith.constant 0 : i32
    %c0_i32_0 = arith.constant 0 : i32
    %c0_i32_1 = arith.constant 0 : i32
    return %c0_i32, %c0_i32_0 : i32, i32
  }
  func.func @transform_4(%arg0: i32) -> (i32, i32) {
    %c0_i32 = arith.constant 0 : i32
    %c0_i32_0 = arith.constant 0 : i32
    %c0_i32_1 = arith.constant 0 : i32
    return %c0_i32, %c0_i32_0 : i32, i32
  }
  func.func @transform_5(%arg0: i32) -> (i32, i32) {
    %c0_i32 = arith.constant 0 : i32
    %c0_i32_0 = arith.constant 0 : i32
    return %arg0, %c0_i32 : i32, i32
  }
}

</mosaic_0001>

<llo_original>
// kernel: discriminator_forward.1
$region0: #{discriminator_forward.1}
  #allocation0 [shape = 'u32[]', space=smem, size = 0x4, offset = 0x4, fixed_abs, tag = 'smem constant byte address 0x4 - core index']
  #allocation1 [shape = 'u32[72,128]{1,0:T(1,128)}', space=vmem, size = 0x9000, scoped, tag = 'internal scratch']
  %s0 = inlined_call_operand.vmem [shape: bf16[16,640], index: 0, kind: input, shape index: {}]
  %s1 = inlined_call_operand.hbm [shape: bf16[640,128], index: 1, kind: input, shape index: {}]
  %s2 = inlined_call_operand.vmem [shape: f32[1,128], index: 2, kind: input, shape index: {}]
  %s3 = inlined_call_operand.vmem [shape: bf16[128,128], index: 3, kind: input, shape index: {}]
  %s4 = inlined_call_operand.vmem [shape: f32[1,128], index: 4, kind: input, shape index: {}]
  %s5 = inlined_call_operand.vmem [shape: f32[16,128], index: 5, kind: output, shape index: {}]
  %s6 = sld [smem:[#allocation0]]
  $region34: #{discriminator_forward.1} parent=0
    _
  %s8 = ssub.s32 1, %s6
  %s9 = scalar_select 0, %s8, %s6
  $region1: #{discriminator_forward.1} parent=0
    #allocation2 [shape = 'u8[163840]{0}', space=vmem, size = 0x28000, scoped, tag = 'input window, operand 1, single buffered']
    #allocation3 [shape = 's32[1]{0}', space=sflag, size = 0x4, scoped, tag = 'scoped memory for discriminator_forward.1']
    %10 = vsyncpa [#allocation3], 0
    // Predicated region
    $region2: #{discriminator_forward.1} parent=1 // pred_check
      _
    $region3: #{discriminator_forward.1} parent=1 // pred_check_branch
      %12 = sbr.rel (0) target = $region5
    $region4: #{discriminator_forward.1} parent=1 // pred_region
      _
    $region5: #{discriminator_forward.1} parent=1 // pred_fallthru
      _
    // Predicated region
    $region6: #{discriminator_forward.1} parent=1 // pred_check
      _
    $region7: #{discriminator_forward.1} parent=1 // pred_check_branch
      %14 = sbr.rel (0) target = $region9
    $region8: #{discriminator_forward.1} parent=1 // pred_region
      %16 = vsyncadd [#allocation3], 0
      %s17 = sshll.u32 %s1, 4
      %s18 = int_to_ptr.hbm [resolvable:$true] %s17
      %s19 = sshll.u32 [#allocation2], 4
      %s20 = int_to_ptr.vmem [resolvable:$true] %s19
      %25 = dma.hbm_to_vmem [thread:$0]  %s18, 5120, %s20, [#allocation3], 64, 64, 4
    $region9: #{discriminator_forward.1} parent=1 // pred_fallthru
      _
    // Predicated region
    $region10: #{discriminator_forward.1} parent=1 // pred_check
      _
    $region11: #{discriminator_forward.1} parent=1 // pred_check_branch
      %27 = sbr.rel (0) target = $region13
    $region12: #{discriminator_forward.1} parent=1 // pred_region
      _
    $region13: #{discriminator_forward.1} parent=1 // pred_fallthru
      _
    // Predicated region
    $region14: #{discriminator_forward.1} parent=1 // pred_check
      _
    $region15: #{discriminator_forward.1} parent=1 // pred_check_branch
      %29 = sbr.rel (0) target = $region17
    $region16: #{discriminator_forward.1} parent=1 // pred_region
      _
    $region17: #{discriminator_forward.1} parent=1 // pred_fallthru
      _
    // Predicated region
    $region18: #{discriminator_forward.1} parent=1 // pred_check
      _
    $region19: #{discriminator_forward.1} parent=1 // pred_check_branch
      %31 = sbr.rel (0) target = $region21
    $region20: #{discriminator_forward.1} parent=1 // pred_region
      _
    $region21: #{discriminator_forward.1} parent=1 // pred_fallthru
      _
    // Predicated region
    $region22: #{discriminator_forward.1} parent=1 // pred_check
      _
    $region23: #{discriminator_forward.1} parent=1 // pred_check_branch
      %33 = sbr.rel (0) target = $region25
    $region24: #{discriminator_forward.1} parent=1 // pred_region
      %35 = dma.done [#allocation3], 5120
    $region25: #{discriminator_forward.1} parent=1 // pred_fallthru
      _
    %v36 = vld [vmem:[%s0] sm:$0xff]
    %v37 = vld [vmem:[%s0 + $0x8] sm:$0xff]
    %v38 = vld [vmem:[%s0 + $0x10] sm:$0xf]
    %v39 = vld [vmem:[%s0 + $0x14] sm:$0xff]
    %v40 = vld [vmem:[%s0 + $0x1c] sm:$0xff]
    %v41 = vld [vmem:[%s0 + $0x24] sm:$0xf]
    %v42 = vld [vmem:[#allocation2] sm:$0xf]
    %v43 = vld [vmem:[#allocation2 + $0x4] sm:$0xf]
    %v44 = vld [vmem:[#allocation2 + $0x8] sm:$0xf]
    %v45 = vld [vmem:[#allocation2 + $0xc] sm:$0xf]
    %v46 = vld [vmem:[#allocation2 + $0x10] sm:$0xf]
    %v47 = vld [vmem:[#allocation2 + $0x14] sm:$0xf]
    %v48 = vld [vmem:[#allocation2 + $0x18] sm:$0xf]
    %v49 = vld [vmem:[#allocation2 + $0x1c] sm:$0xf]
    %v50 = vld [vmem:[#allocation2 + $0x20] sm:$0xf]
    %v51 = vld [vmem:[#allocation2 + $0x24] sm:$0xf]
    %v52 = vld [vmem:[#allocation2 + $0x28] sm:$0xf]
    %v53 = vld [vmem:[#allocation2 + $0x2c] sm:$0xf]
    %v54 = vld [vmem:[#allocation2 + $0x30] sm:$0xf]
    %v55 = vld [vmem:[#allocation2 + $0x34] sm:$0xf]
    %v56 = vld [vmem:[#allocation2 + $0x38] sm:$0xf]
    %v57 = vld [vmem:[#allocation2 + $0x3c] sm:$0xf]
    %v58 = vld [vmem:[#allocation2 + $0x40] sm:$0xf]
    %v59 = vld [vmem:[#allocation2 + $0x44] sm:$0xf]
    %v60 = vld [vmem:[#allocation2 + $0x48] sm:$0xf]
    %v61 = vld [vmem:[#allocation2 + $0x4c] sm:$0xf]
    %v62 = vld [vmem:[#allocation2 + $0x50] sm:$0xf]
    %v63 = vld [vmem:[#allocation2 + $0x54] sm:$0xf]
    %v64 = vld [vmem:[#allocation2 + $0x58] sm:$0xf]
    %v65 = vld [vmem:[#allocation2 + $0x5c] sm:$0xf]
    %v66 = vld [vmem:[#allocation2 + $0x60] sm:$0xf]
    %v67 = vld [vmem:[#allocation2 + $0x64] sm:$0xf]
    %v68 = vld [vmem:[#allocation2 + $0x68] sm:$0xf]
    %v69 = vld [vmem:[#allocation2 + $0x6c] sm:$0xf]
    %v70 = vld [vmem:[#allocation2 + $0x70] sm:$0xf]
    %v71 = vld [vmem:[#allocation2 + $0x74] sm:$0xf]
    %v72 = vld [vmem:[#allocation2 + $0x78] sm:$0xf]
    %v73 = vld [vmem:[#allocation2 + $0x7c] sm:$0xf]
    %v74 = vld [vmem:[#allocation2 + $0x80] sm:$0xf]
    %v75 = vld [vmem:[#allocation2 + $0x84] sm:$0xf]
    %v76 = vld [vmem:[#allocation2 + $0x88] sm:$0xf]
    %v77 = vld [vmem:[#allocation2 + $0x8c] sm:$0xf]
    %v78 = vld [vmem:[#allocation2 + $0x90] sm:$0xf]
    %v79 = vld [vmem:[#allocation2 + $0x94] sm:$0xf]
    %v80 = vld [vmem:[#allocation2 + $0x98] sm:$0xf]
    %v81 = vld [vmem:[#allocation2 + $0x9c] sm:$0xf]
    %v82 = vld [vmem:[#allocation2 + $0xa0] sm:$0xf]
    %v83 = vld [vmem:[#allocation2 + $0xa4] sm:$0xf]
    %v84 = vld [vmem:[#allocation2 + $0xa8] sm:$0xf]
    %v85 = vld [vmem:[#allocation2 + $0xac] sm:$0xf]
    %v86 = vld [vmem:[#allocation2 + $0xb0] sm:$0xf]
    %v87 = vld [vmem:[#allocation2 + $0xb4] sm:$0xf]
    %v88 = vld [vmem:[#allocation2 + $0xb8] sm:$0xf]
    %v89 = vld [vmem:[#allocation2 + $0xbc] sm:$0xf]
    %v90 = vld [vmem:[#allocation2 + $0xc0] sm:$0xf]
    %v91 = vld [vmem:[#allocation2 + $0xc4] sm:$0xf]
    %v92 = vld [vmem:[#allocation2 + $0xc8] sm:$0xf]
    %v93 = vld [vmem:[#allocation2 + $0xcc] sm:$0xf]
    %v94 = vld [vmem:[#allocation2 + $0xd0] sm:$0xf]
    %v95 = vld [vmem:[#allocation2 + $0xd4] sm:$0xf]
    %v96 = vld [vmem:[#allocation2 + $0xd8] sm:$0xf]
    %v97 = vld [vmem:[#allocation2 + $0xdc] sm:$0xf]
    %v98 = vld [vmem:[#allocation2 + $0xe0] sm:$0xf]
    %v99 = vld [vmem:[#allocation2 + $0xe4] sm:$0xf]
    %v100 = vld [vmem:[#allocation2 + $0xe8] sm:$0xf]
    %v101 = vld [vmem:[#allocation2 + $0xec] sm:$0xf]
    %v102 = vld [vmem:[#allocation2 + $0xf0] sm:$0xf]
    %v103 = vld [vmem:[#allocation2 + $0xf4] sm:$0xf]
    %v104 = vld [vmem:[#allocation2 + $0xf8] sm:$0xf]
    %v105 = vld [vmem:[#allocation2 + $0xfc] sm:$0xf]
    %v106 = vld [vmem:[#allocation2 + $0x100] sm:$0xf]
    %v107 = vld [vmem:[#allocation2 + $0x104] sm:$0xf]
    %v108 = vld [vmem:[#allocation2 + $0x108] sm:$0xf]
    %v109 = vld [vmem:[#allocation2 + $0x10c] sm:$0xf]
    %v110 = vld [vmem:[#allocation2 + $0x110] sm:$0xf]
    %v111 = vld [vmem:[#allocation2 + $0x114] sm:$0xf]
    %v112 = vld [vmem:[#allocation2 + $0x118] sm:$0xf]
    %v113 = vld [vmem:[#allocation2 + $0x11c] sm:$0xf]
    %v114 = vld [vmem:[#allocation2 + $0x120] sm:$0xf]
    %v115 = vld [vmem:[#allocation2 + $0x124] sm:$0xf]
    %v116 = vld [vmem:[#allocation2 + $0x128] sm:$0xf]
    %v117 = vld [vmem:[#allocation2 + $0x12c] sm:$0xf]
    %v118 = vld [vmem:[#allocation2 + $0x130] sm:$0xf]
    %v119 = vld [vmem:[#allocation2 + $0x134] sm:$0xf]
    %v120 = vld [vmem:[#allocation2 + $0x138] sm:$0xf]
    %v121 = vld [vmem:[#allocation2 + $0x13c] sm:$0xf]
    %v122 = vld [vmem:[%s2] sm:$0x1]
    %v124 = vperm.slane %v122, 0
    %v132 = vunpack.c.l.b16 %v36
    %v133 = vunpack.c.h.b16 %v36
    %v134 = vunpack.c.l.b16 %v37
    %v135 = vunpack.c.h.b16 %v37
    %v136 = vunpack.c.l.b16 %v38
    %v137 = vunpack.c.l.b16 %v39
    %v138 = vunpack.c.h.b16 %v39
    %v139 = vunpack.c.l.b16 %v40
    %v140 = vunpack.c.h.b16 %v40
    %v141 = vunpack.c.l.b16 %v41
    %v142 = vpack.c.b16 %v137, %v132
    %v143 = vpack.c.b16 %v138, %v133
    %v144 = vpack.c.b16 %v139, %v134
    %v145 = vpack.c.b16 %v140, %v135
    %v146 = vpack.c.b16 %v141, %v136
    %v232 = vunpack.c.l.b16 %v42
    %v233 = vunpack.c.l.b16 %v43
    %v234 = vunpack.c.l.b16 %v44
    %v235 = vunpack.c.l.b16 %v45
    %v236 = vunpack.c.l.b16 %v46
    %v237 = vunpack.c.l.b16 %v47
    %v238 = vunpack.c.l.b16 %v48
    %v239 = vunpack.c.l.b16 %v49
    %v240 = vunpack.c.l.b16 %v50
    %v241 = vunpack.c.l.b16 %v51
    %v242 = vunpack.c.l.b16 %v52
    %v243 = vunpack.c.l.b16 %v53
    %v244 = vunpack.c.l.b16 %v54
    %v245 = vunpack.c.l.b16 %v55
    %v246 = vunpack.c.l.b16 %v56
    %v247 = vunpack.c.l.b16 %v57
    %v248 = vunpack.c.l.b16 %v58
    %v249 = vunpack.c.l.b16 %v59
    %v250 = vunpack.c.l.b16 %v60
    %v251 = vunpack.c.l.b16 %v61
    %v252 = vunpack.c.l.b16 %v62
    %v253 = vunpack.c.l.b16 %v63
    %v254 = vunpack.c.l.b16 %v64
    %v255 = vunpack.c.l.b16 %v65
    %v256 = vunpack.c.l.b16 %v66
    %v257 = vunpack.c.l.b16 %v67
    %v258 = vunpack.c.l.b16 %v68
    %v259 = vunpack.c.l.b16 %v69
    %v260 = vunpack.c.l.b16 %v70
    %v261 = vunpack.c.l.b16 %v71
    %v262 = vunpack.c.l.b16 %v72
    %v263 = vunpack.c.l.b16 %v73
    %v264 = vunpack.c.l.b16 %v74
    %v265 = vunpack.c.l.b16 %v75
    %v266 = vunpack.c.l.b16 %v76
    %v267 = vunpack.c.l.b16 %v77
    %v268 = vunpack.c.l.b16 %v78
    %v269 = vunpack.c.l.b16 %v79
    %v270 = vunpack.c.l.b16 %v80
    %v271 = vunpack.c.l.b16 %v81
    %v272 = vunpack.c.l.b16 %v82
    %v273 = vunpack.c.l.b16 %v83
    %v274 = vunpack.c.l.b16 %v84
    %v275 = vunpack.c.l.b16 %v85
    %v276 = vunpack.c.l.b16 %v86
    %v277 = vunpack.c.l.b16 %v87
    %v278 = vunpack.c.l.b16 %v88
    %v279 = vunpack.c.l.b16 %v89
    %v280 = vunpack.c.l.b16 %v90
    %v281 = vunpack.c.l.b16 %v91
    %v282 = vunpack.c.l.b16 %v92
    %v283 = vunpack.c.l.b16 %v93
    %v284 = vunpack.c.l.b16 %v94
    %v285 = vunpack.c.l.b16 %v95
    %v286 = vunpack.c.l.b16 %v96
    %v287 = vunpack.c.l.b16 %v97
    %v288 = vunpack.c.l.b16 %v98
    %v289 = vunpack.c.l.b16 %v99
    %v290 = vunpack.c.l.b16 %v100
    %v291 = vunpack.c.l.b16 %v101
    %v292 = vunpack.c.l.b16 %v102
    %v293 = vunpack.c.l.b16 %v103
    %v294 = vunpack.c.l.b16 %v104
    %v295 = vunpack.c.l.b16 %v105
    %v296 = vunpack.c.l.b16 %v106
    %v297 = vunpack.c.l.b16 %v107
    %v298 = vunpack.c.l.b16 %v108
    %v299 = vunpack.c.l.b16 %v109
    %v300 = vunpack.c.l.b16 %v110
    %v301 = vunpack.c.l.b16 %v111
    %v302 = vunpack.c.l.b16 %v112
    %v303 = vunpack.c.l.b16 %v113
    %v304 = vunpack.c.l.b16 %v114
    %v305 = vunpack.c.l.b16 %v115
    %v306 = vunpack.c.l.b16 %v116
    %v307 = vunpack.c.l.b16 %v117
    %v308 = vunpack.c.l.b16 %v118
    %v309 = vunpack.c.l.b16 %v119
    %v310 = vunpack.c.l.b16 %v120
    %v311 = vunpack.c.l.b16 %v121
    %v312 = vpack.c.b16 %v233, %v232
    %v313 = vpack.c.b16 %v235, %v234
    %v314 = vpack.c.b16 %v237, %v236
    %v315 = vpack.c.b16 %v239, %v238
    %v316 = vpack.c.b16 %v241, %v240
    %v317 = vpack.c.b16 %v243, %v242
    %v318 = vpack.c.b16 %v245, %v244
    %v319 = vpack.c.b16 %v247, %v246
    %v320 = vpack.c.b16 %v249, %v248
    %v321 = vpack.c.b16 %v251, %v250
    %v322 = vpack.c.b16 %v253, %v252
    %v323 = vpack.c.b16 %v255, %v254
    %v324 = vpack.c.b16 %v257, %v256
    %v325 = vpack.c.b16 %v259, %v258
    %v326 = vpack.c.b16 %v261, %v260
    %v327 = vpack.c.b16 %v263, %v262
    %v328 = vpack.c.b16 %v265, %v264
    %v329 = vpack.c.b16 %v267, %v266
    %v330 = vpack.c.b16 %v269, %v268
    %v331 = vpack.c.b16 %v271, %v270
    %v332 = vpack.c.b16 %v273, %v272
    %v333 = vpack.c.b16 %v275, %v274
    %v334 = vpack.c.b16 %v277, %v276
    %v335 = vpack.c.b16 %v279, %v278
    %v336 = vpack.c.b16 %v281, %v280
    %v337 = vpack.c.b16 %v283, %v282
    %v338 = vpack.c.b16 %v285, %v284
    %v339 = vpack.c.b16 %v287, %v286
    %v340 = vpack.c.b16 %v289, %v288
    %v341 = vpack.c.b16 %v291, %v290
    %v342 = vpack.c.b16 %v293, %v292
    %v343 = vpack.c.b16 %v295, %v294
    %v344 = vpack.c.b16 %v297, %v296
    %v345 = vpack.c.b16 %v299, %v298
    %v346 = vpack.c.b16 %v301, %v300
    %v347 = vpack.c.b16 %v303, %v302
    %v348 = vpack.c.b16 %v305, %v304
    %v349 = vpack.c.b16 %v307, %v306
    %v350 = vpack.c.b16 %v309, %v308
    %v351 = vpack.c.b16 %v311, %v310
    %392 = vmatpush.bf16.msra.mxu0 %v319
    %393 = vmatpush.bf16.msra.mxu0 %v318
    %394 = vmatpush.bf16.msra.mxu0 %v317
    %395 = vmatpush.bf16.msra.mxu0 %v316
    %396 = vmatpush.bf16.msra.mxu0 %v315
    %397 = vmatpush.bf16.msra.mxu0 %v314
    %398 = vmatpush.bf16.msra.mxu0 %v313
    %399 = vmatpush.bf16.msra.mxu0 %v312
    %400 = vmatmul.bf16.gmra.mxu0 %v142
    %v401 = vpop.f32.mrf.mxu0
    %v402 = vadd.f32 %v124, %v401
    %v403 = vpop.f32.mrf.mxu0
    %v404 = vadd.f32 %v124, %v403
    %405 = vdwg.mxu0
    %406 = vmatpush.bf16.msra.mxu0 %v327
    %407 = vmatpush.bf16.msra.mxu0 %v326
    %408 = vmatpush.bf16.msra.mxu0 %v325
    %409 = vmatpush.bf16.msra.mxu0 %v324
    %410 = vmatpush.bf16.msra.mxu0 %v323
    %411 = vmatpush.bf16.msra.mxu0 %v322
    %412 = vmatpush.bf16.msra.mxu0 %v321
    %413 = vmatpush.bf16.msra.mxu0 %v320
    %414 = vmatmul.bf16.gmra.mxu0 %v143
    %v415 = vpop.f32.mrf.mxu0
    %v416 = vadd.f32 %v402, %v415
    %v417 = vpop.f32.mrf.mxu0
    %v418 = vadd.f32 %v404, %v417
    %419 = vdwg.mxu0
    %420 = vmatpush.bf16.msra.mxu0 %v335
    %421 = vmatpush.bf16.msra.mxu0 %v334
    %422 = vmatpush.bf16.msra.mxu0 %v333
    %423 = vmatpush.bf16.msra.mxu0 %v332
    %424 = vmatpush.bf16.msra.mxu0 %v331
    %425 = vmatpush.bf16.msra.mxu0 %v330
    %426 = vmatpush.bf16.msra.mxu0 %v329
    %427 = vmatpush.bf16.msra.mxu0 %v328
    %428 = vmatmul.bf16.gmra.mxu0 %v144
    %v429 = vpop.f32.mrf.mxu0
    %v430 = vadd.f32 %v416, %v429
    %v431 = vpop.f32.mrf.mxu0
    %v432 = vadd.f32 %v418, %v431
    %433 = vdwg.mxu0
    %434 = vmatpush.bf16.msra.mxu0 %v343
    %435 = vmatpush.bf16.msra.mxu0 %v342
    %436 = vmatpush.bf16.msra.mxu0 %v341
    %437 = vmatpush.bf16.msra.mxu0 %v340
    %438 = vmatpush.bf16.msra.mxu0 %v339
    %439 = vmatpush.bf16.msra.mxu0 %v338
    %440 = vmatpush.bf16.msra.mxu0 %v337
    %441 = vmatpush.bf16.msra.mxu0 %v336
    %442 = vmatmul.bf16.gmra.mxu0 %v145
    %v443 = vpop.f32.mrf.mxu0
    %v444 = vadd.f32 %v430, %v443
    %v445 = vpop.f32.mrf.mxu0
    %v446 = vadd.f32 %v432, %v445
    %447 = vdwg.mxu0
    %448 = vmatpush.bf16.msra.mxu0 %v351
    %449 = vmatpush.bf16.msra.mxu0 %v350
    %450 = vmatpush.bf16.msra.mxu0 %v349
    %451 = vmatpush.bf16.msra.mxu0 %v348
    %452 = vmatpush.bf16.msra.mxu0 %v347
    %453 = vmatpush.bf16.msra.mxu0 %v346
    %454 = vmatpush.bf16.msra.mxu0 %v345
    %455 = vmatpush.bf16.msra.mxu0 %v344
    %456 = vmatmul.bf16.gmra.mxu0 %v146
    %v457 = vpop.f32.mrf.mxu0
    %v458 = vadd.f32 %v444, %v457
    %v459 = vpop.f32.mrf.mxu0
    %v460 = vadd.f32 %v446, %v459
    %461 = vdwg.mxu0
    %v462 = vmax.f32 %v458, 0.0
    %v463 = vmax.f32 %v460, 0.0
    %v464 = vpack.c.bf16 %v463, %v462
    %v465 = vld [vmem:[%s3] sm:$0xf]
    %v466 = vld [vmem:[%s3 + $0x4] sm:$0xf]
    %v467 = vld [vmem:[%s3 + $0x8] sm:$0xf]
    %v468 = vld [vmem:[%s3 + $0xc] sm:$0xf]
    %v469 = vld [vmem:[%s3 + $0x10] sm:$0xf]
    %v470 = vld [vmem:[%s3 + $0x14] sm:$0xf]
    %v471 = vld [vmem:[%s3 + $0x18] sm:$0xf]
    %v472 = vld [vmem:[%s3 + $0x1c] sm:$0xf]
    %v473 = vld [vmem:[%s3 + $0x20] sm:$0xf]
    %v474 = vld [vmem:[%s3 + $0x24] sm:$0xf]
    %v475 = vld [vmem:[%s3 + $0x28] sm:$0xf]
    %v476 = vld [vmem:[%s3 + $0x2c] sm:$0xf]
    %v477 = vld [vmem:[%s3 + $0x30] sm:$0xf]
    %v478 = vld [vmem:[%s3 + $0x34] sm:$0xf]
    %v479 = vld [vmem:[%s3 + $0x38] sm:$0xf]
    %v480 = vld [vmem:[%s3 + $0x3c] sm:$0xf]
    %v481 = vld [vmem:[%s4] sm:$0x1]
    %v483 = vperm.slane %v481, 0
    %v501 = vunpack.c.l.b16 %v465
    %v502 = vunpack.c.l.b16 %v466
    %v503 = vunpack.c.l.b16 %v467
    %v504 = vunpack.c.l.b16 %v468
    %v505 = vunpack.c.l.b16 %v469
    %v506 = vunpack.c.l.b16 %v470
    %v507 = vunpack.c.l.b16 %v471
    %v508 = vunpack.c.l.b16 %v472
    %v509 = vunpack.c.l.b16 %v473
    %v510 = vunpack.c.l.b16 %v474
    %v511 = vunpack.c.l.b16 %v475
    %v512 = vunpack.c.l.b16 %v476
    %v513 = vunpack.c.l.b16 %v477
    %v514 = vunpack.c.l.b16 %v478
    %v515 = vunpack.c.l.b16 %v479
    %v516 = vunpack.c.l.b16 %v480
    %v517 = vpack.c.b16 %v502, %v501
    %v518 = vpack.c.b16 %v504, %v503
    %v519 = vpack.c.b16 %v506, %v505
    %v520 = vpack.c.b16 %v508, %v507
    %v521 = vpack.c.b16 %v510, %v509
    %v522 = vpack.c.b16 %v512, %v511
    %v523 = vpack.c.b16 %v514, %v513
    %v524 = vpack.c.b16 %v516, %v515
    %533 = vmatpush.bf16.msra.mxu0 %v524
    %534 = vmatpush.bf16.msra.mxu0 %v523
    %535 = vmatpush.bf16.msra.mxu0 %v522
    %536 = vmatpush.bf16.msra.mxu0 %v521
    %537 = vmatpush.bf16.msra.mxu0 %v520
    %538 = vmatpush.bf16.msra.mxu0 %v519
    %539 = vmatpush.bf16.msra.mxu0 %v518
    %540 = vmatpush.bf16.msra.mxu0 %v517
    %541 = vmatmul.bf16.gmra.mxu0 %v464
    %v542 = vpop.f32.mrf.mxu0
    %v543 = vadd.f32 %v483, %v542
    %v544 = vpop.f32.mrf.mxu0
    %v545 = vadd.f32 %v483, %v544
    %546 = vdwg.mxu0
    %547 = vmax.xlane.f32.xlu0 %v543
    %v548 = vpop.xlane.xlu0 %547
    %549 = vmax.xlane.f32.xlu0 %v545
    %v550 = vpop.xlane.xlu0 %549
    %v551 = vsub.f32 %v543, %v548
    %v552 = vsub.f32 %v545, %v550
    %v553 = vmul.f32 %v551, 1.442695
    %v554 = vpow.pop %v553
    %v555 = vmul.f32 %v552, 1.442695
    %v556 = vpow.pop %v555
    %557 = vadd.xlane.f32.xlu0 %v554
    %v558 = vpop.xlane.xlu0 %557
    %559 = vadd.xlane.f32.xlu0 %v556
    %v560 = vpop.xlane.xlu0 %559
    %v561 = vlog2.pop %v558
    %v562 = vmul.f32 %v561, 0.6931472
    %v563 = vlog2.pop %v560
    %v564 = vmul.f32 %v563, 0.6931472
    %v565 = vsub.f32 %v551, %v562
    %v566 = vsub.f32 %v552, %v564
    %567 = vst [vmem:[%s5] sm:$0xff] %v565
    %568 = vst [vmem:[%s5 + $0x8] sm:$0xff] %v566
    // Predicated region
    $region26: #{discriminator_forward.1} parent=1 // pred_check
      _
    $region27: #{discriminator_forward.1} parent=1 // pred_check_branch
      %570 = sbr.rel (0) target = $region29
    $region28: #{discriminator_forward.1} parent=1 // pred_region
      _
    $region29: #{discriminator_forward.1} parent=1 // pred_fallthru
      _
    // Predicated region
    $region30: #{discriminator_forward.1} parent=1 // pred_check
      _
    $region31: #{discriminator_forward.1} parent=1 // pred_check_branch
      %572 = sbr.rel (0) target = $region33
    $region32: #{discriminator_forward.1} parent=1 // pred_region
      _
    $region33: #{discriminator_forward.1} parent=1 // pred_fallthru
      _
    %573 = vsyncpa [#allocation3], 1

</llo_original>
